<compile_context>
chip_gen: v7x
topology: tpu7x:2x2x1
jax: 0.10.0
libtpu: 0.0.40
codegen_flags: <defaults>
</compile_context>

<pallas_src>
import functools

import jax
import jax.numpy as jnp
from jax.experimental import pallas as pl
from jax.experimental.pallas import tpu as pltpu

NEG_INF = -1e30
LANE = 128
SUBLANE = 8


def _round_up(x, m):
    return (x + m - 1) // m * m


# =======================  fused Pallas kernel  =======================

def _mlp_softmax_kernel(x_ref, w1_ref, b1_ref, w2_ref, b2_ref, o_ref, *, out_size):
    # Linear 1 (bf16 MXU inputs, f32 accumulation) + ReLU.  x arrives as bf16.
    h = jnp.dot(x_ref[...], w1_ref[...], preferred_element_type=jnp.float32) + b1_ref[...]
    h = jnp.maximum(h, 0.0)

    # Linear 2 -> logits over the lane-padded (128-wide) class slab.
    z = jnp.dot(h.astype(jnp.bfloat16), w2_ref[...],
                preferred_element_type=jnp.float32) + b2_ref[...]

    # Mask padded class lanes in-kernel (iota mask, no mask tensor DMA).
    lane = jax.lax.broadcasted_iota(jnp.int32, z.shape, 1)
    z = jnp.where(lane < out_size, z, NEG_INF)

    # Softmax over the class dim; padded lanes contribute exp(-huge) = 0.
    z = z - jnp.max(z, axis=-1, keepdims=True)
    e = jnp.exp(z)
    inv = pl.reciprocal(jnp.sum(e, axis=-1, keepdims=True), approx=True)
    p = e * inv

    # Narrow store: only the real classes go back to HBM (byte-minimal stream).
    o_ref[...] = p[:, :out_size].astype(o_ref.dtype)


# =======================  one-time weight preparation  =======================

def prepare_params(params):
    """Hoisted out of the hot path: bf16 weights, lane-padded class dim, 2-D biases."""
    w1, b1 = params["l1"]["w"], params["l1"]["b"]          # (Din, E), (E,)
    w2, b2 = params["l2"]["w"], params["l2"]["b"]          # (E, OUT), (OUT,)
    E, OUT = w2.shape
    OUT_PAD = _round_up(OUT, LANE)

    w1b = w1.astype(jnp.bfloat16)
    w2b = jnp.zeros((E, OUT_PAD), jnp.bfloat16).at[:, :OUT].set(w2.astype(jnp.bfloat16))
    b1r = b1.reshape(1, E).astype(jnp.float32)
    b2r = jnp.zeros((1, OUT_PAD), jnp.float32).at[:, :OUT].set(b2.astype(jnp.float32))
    return {"w1": w1b, "b1": b1r, "w2": w2b, "b2": b2r, "out_size": OUT}


# =======================  wrapper  =======================

def mlp_softmax(x, prep, *, block_rows=4096):
    """x: (B, S, input_size) f32  ->  (B, S, output_size) f32, softmax over dim=2."""
    B, S, Din = x.shape
    w1b, b1r, w2b, b2r = prep["w1"], prep["b1"], prep["w2"], prep["b2"]
    OUT = prep["out_size"]
    E = w1b.shape[1]
    OUT_PAD = w2b.shape[1]

    N = B * S
    # Rows per grid step: large (amortize ~0.35 us/step), sublane-aligned, and
    # capped at ceil(N/2) so the "parallel" row axis has >= 2 steps (v7x megacore).
    TM = max(SUBLANE, min(block_rows, _round_up(pl.cdiv(N, 2), SUBLANE)))
    grid = (pl.cdiv(N, TM),)

    # Single fused XLA op: reshape + bf16 cast (halves the x HBM stream).  No pad copy.
    x2 = x.reshape(N, Din).astype(jnp.bfloat16)

    kern = functools.partial(_mlp_softmax_kernel, out_size=OUT)
    out = pl.pallas_call(
        kern,
        out_shape=jax.ShapeDtypeStruct((N, OUT), jnp.float32),
        grid=grid,
        in_specs=[
            pl.BlockSpec((TM, Din), lambda i: (i, 0)),      # activations: tiled rows (bf16)
            pl.BlockSpec((Din, E), lambda i: (0, 0)),       # w1: resident across grid
            pl.BlockSpec((1, E), lambda i: (0, 0)),         # b1
            pl.BlockSpec((E, OUT_PAD), lambda i: (0, 0)),   # w2 (lane-padded, bf16)
            pl.BlockSpec((1, OUT_PAD), lambda i: (0, 0)),   # b2 (lane-padded)
        ],
        out_specs=pl.BlockSpec((TM, OUT), lambda i: (i, 0)),  # unpadded, byte-minimal store
        compiler_params=pltpu.CompilerParams(
            dimension_semantics=("parallel",)),
    )(x2, w1b, b1r, w2b, b2r)

    return out.reshape(B, S, OUT)


# =======================  deterministic parameter init  =======================

def init_params(key, input_size, embedding_size, output_size):
    k1, k2, k3, k4 = jax.random.split(key, 4)

    def xavier_relu(k, fan_in, fan_out):
        gain = 2.0 ** 0.5                                   # init.calculate_gain('relu')
        bound = gain * (6.0 / (fan_in + fan_out)) ** 0.5
        return jax.random.uniform(k, (fan_in, fan_out), jnp.float32, -bound, bound)

    def bias(k, fan_in, fan_out):
        bound = 1.0 / (fan_in ** 0.5)                       # nn.Linear default bias init
        return jax.random.uniform(k, (fan_out,), jnp.float32, -bound, bound)

    return {
        "l1": {"w": xavier_relu(k1, input_size, embedding_size),
               "b": bias(k2, input_size, embedding_size)},
        "l2": {"w": xavier_relu(k3, embedding_size, output_size),
               "b": bias(k4, embedding_size, output_size)},
    }


def _reference(x, params):
    """Pure-JAX reference of MLP_Softmax.forward (f32)."""
    h = jnp.maximum(x @ params["l1"]["w"] + params["l1"]["b"], 0.0)
    z = h @ params["l2"]["w"] + params["l2"]["b"]
    return jax.nn.softmax(z, axis=-1)


# =======================  main  =======================

if __name__ == "__main__":
    key = jax.random.PRNGKey(0)
    k_param, k_in = jax.random.split(key)

    B, S = 2, 8
    INPUT_SIZE, EMBED_SIZE, OUTPUT_SIZE = 32, 64, 20

    params = init_params(k_param, INPUT_SIZE, EMBED_SIZE, OUTPUT_SIZE)
    prep = prepare_params(params)                 # one-time weight prep (hoisted)
    x = jax.random.normal(k_in, (B, S, INPUT_SIZE), jnp.float32)

    out = jax.jit(lambda xx: mlp_softmax(xx, prep))(x)
    out = jax.block_until_ready(out)

    assert out.shape == (B, S, OUTPUT_SIZE), out.shape
    assert bool(jnp.all(jnp.isfinite(out)))
    assert bool(jnp.all(out >= 0.0))
    row_sums = jnp.sum(out, axis=-1)
    assert bool(jnp.all(jnp.abs(row_sums - 1.0) < 5e-3)), "softmax rows must sum to 1"

    ref = _reference(x, params)
    assert bool(jnp.max(jnp.abs(out - ref)) < 2e-2), float(jnp.max(jnp.abs(out - ref)))

    print("KERNEL_OK")
</pallas_src>

<mosaic_0001>
module attributes {stable_mosaic.version = 11 : i64} {
  func.func @_mlp_softmax_kernel(%arg0: i32, %arg1: memref<8x32xbf16, #tpu.memory_space<vmem>>, %arg2: memref<32x64xbf16, #tpu.memory_space<vmem>>, %arg3: memref<1x64xf32, #tpu.memory_space<vmem>>, %arg4: memref<64x128xbf16, #tpu.memory_space<vmem>>, %arg5: memref<1x128xf32, #tpu.memory_space<vmem>>, %arg6: memref<8x20xf32, #tpu.memory_space<vmem>>) attributes {dimension_semantics = [#tpu.dimension_semantics<parallel>], iteration_bounds = array<i64: 2>, scalar_prefetch = 0 : i64, scratch_operands = 0 : i64, tpu.core_type = #tpu.core_type<tc>, window_params = [{transform_indices = @transform_0, window_bounds = array<i64: 8, 32>}, {pipeline_mode = #tpu.pipeline_mode<synchronous>, transform_indices = @transform_1, window_bounds = array<i64: 32, 64>}, {pipeline_mode = #tpu.pipeline_mode<synchronous>, transform_indices = @transform_2, window_bounds = array<i64: 1, 64>}, {pipeline_mode = #tpu.pipeline_mode<synchronous>, transform_indices = @transform_3, window_bounds = array<i64: 64, 128>}, {pipeline_mode = #tpu.pipeline_mode<synchronous>, transform_indices = @transform_4, window_bounds = array<i64: 1, 128>}, {transform_indices = @transform_5, window_bounds = array<i64: 8, 20>}]} {
    %c0 = arith.constant 0 : index
    %c0_0 = arith.constant 0 : index
    %0 = vector.load %arg1[%c0, %c0_0] : memref<8x32xbf16, #tpu.memory_space<vmem>>, vector<8x32xbf16>
    %c0_1 = arith.constant 0 : index
    %c0_2 = arith.constant 0 : index
    %1 = vector.load %arg2[%c0_1, %c0_2] : memref<32x64xbf16, #tpu.memory_space<vmem>>, vector<32x64xbf16>
    %cst = arith.constant dense<0.000000e+00> : vector<8x64xf32>
    %2 = tpu.matmul %0, %1, %cst {dimension_numbers = #tpu.dot_dimension_numbers<[1], [0], [0], [1], [0, 0, 1, 1], [], []>} : vector<8x32xbf16>, vector<32x64xbf16>, vector<8x64xf32> -> vector<8x64xf32>
    %c0_3 = arith.constant 0 : index
    %c0_4 = arith.constant 0 : index
    %3 = vector.load %arg3[%c0_3, %c0_4] : memref<1x64xf32, #tpu.memory_space<vmem>>, vector<1x64xf32>
    %4 = vector.broadcast %3 : vector<1x64xf32> to vector<8x64xf32>
    %5 = arith.addf %2, %4 : vector<8x64xf32>
    %cst_5 = arith.constant 0.000000e+00 : f32
    %6 = vector.broadcast %cst_5 : f32 to vector<8x64xf32>
    %7 = arith.maximumf %5, %6 : vector<8x64xf32>
    %8 = arith.truncf %7 : vector<8x64xf32> to vector<8x64xbf16>
    %c0_6 = arith.constant 0 : index
    %c0_7 = arith.constant 0 : index
    %9 = vector.load %arg4[%c0_6, %c0_7] : memref<64x128xbf16, #tpu.memory_space<vmem>>, vector<64x128xbf16>
    %cst_8 = arith.constant dense<0.000000e+00> : vector<8x128xf32>
    %10 = tpu.matmul %8, %9, %cst_8 {dimension_numbers = #tpu.dot_dimension_numbers<[1], [0], [0], [1], [0, 0, 1, 1], [], []>} : vector<8x64xbf16>, vector<64x128xbf16>, vector<8x128xf32> -> vector<8x128xf32>
    %c0_9 = arith.constant 0 : index
    %c0_10 = arith.constant 0 : index
    %11 = vector.load %arg5[%c0_9, %c0_10] : memref<1x128xf32, #tpu.memory_space<vmem>>, vector<1x128xf32>
    %12 = vector.broadcast %11 : vector<1x128xf32> to vector<8x128xf32>
    %13 = arith.addf %10, %12 : vector<8x128xf32>
    %14 = tpu.iota {dimensions = array<i32: 1>} : vector<8x128xi32>
    %c20_i32 = arith.constant 20 : i32
    %15 = vector.broadcast %c20_i32 : i32 to vector<8x128xi32>
    %16 = arith.cmpi slt, %14, %15 : vector<8x128xi32>
    %cst_11 = arith.constant -1.000000e+30 : f32
    %17 = vector.broadcast %cst_11 : f32 to vector<8x128xf32>
    %18 = arith.select %16, %13, %17 : vector<8x128xi1>, vector<8x128xf32>
    %cst_12 = arith.constant dense<0xFF800000> : vector<8xf32>
    %19 = vector.multi_reduction <maximumf>, %18, %cst_12 [1] : vector<8x128xf32> to vector<8xf32>
    %20 = vector.shape_cast %19 : vector<8xf32> to vector<8x1xf32>
    %21 = vector.broadcast %20 : vector<8x1xf32> to vector<8x128xf32>
    %22 = arith.subf %18, %21 : vector<8x128xf32>
    %23 = math.exp %22 : vector<8x128xf32>
    %cst_13 = arith.constant dense<0.000000e+00> : vector<8xf32>
    %24 = vector.multi_reduction <add>, %23, %cst_13 [1] : vector<8x128xf32> to vector<8xf32>
    %25 = vector.shape_cast %24 : vector<8xf32> to vector<8x1xf32>
    %26 = tpu.reciprocal %25 {approx = true} : vector<8x1xf32> -> vector<8x1xf32>
    %27 = vector.broadcast %26 : vector<8x1xf32> to vector<8x128xf32>
    %28 = arith.mulf %23, %27 : vector<8x128xf32>
    %29 = vector.extract_strided_slice %28 {offsets = [0, 0], sizes = [8, 20], strides = [1, 1]} : vector<8x128xf32> to vector<8x20xf32>
    %c0_14 = arith.constant 0 : index
    %c0_15 = arith.constant 0 : index
    %30 = vector.load %arg6[%c0_14, %c0_15] : memref<8x20xf32, #tpu.memory_space<vmem>>, vector<8x20xf32>
    tpu.vector_store %arg6[%c0_14, %c0_15], %29 {strides = array<i32>} : memref<8x20xf32, #tpu.memory_space<vmem>>, vector<8x20xf32>,
    return
  }
  func.func @transform_0(%arg0: i32) -> (i32, i32) {
    %c0_i32 = arith.constant 0 : i32
    %c0_i32_0 = arith.constant 0 : i32
    return %arg0, %c0_i32 : i32, i32
  }
  func.func @transform_1(%arg0: i32) -> (i32, i32) {
    %c0_i32 = arith.constant 0 : i32
    %c0_i32_0 = arith.constant 0 : i32
    %c0_i32_1 = arith.constant 0 : i32
    return %c0_i32, %c0_i32_0 : i32, i32
  }
  func.func @transform_2(%arg0: i32) -> (i32, i32) {
    %c0_i32 = arith.constant 0 : i32
    %c0_i32_0 = arith.constant 0 : i32
    %c0_i32_1 = arith.constant 0 : i32
    return %c0_i32, %c0_i32_0 : i32, i32
  }
  func.func @transform_3(%arg0: i32) -> (i32, i32) {
    %c0_i32 = arith.constant 0 : i32
    %c0_i32_0 = arith.constant 0 : i32
    %c0_i32_1 = arith.constant 0 : i32
    return %c0_i32, %c0_i32_0 : i32, i32
  }
  func.func @transform_4(%arg0: i32) -> (i32, i32) {
    %c0_i32 = arith.constant 0 : i32
    %c0_i32_0 = arith.constant 0 : i32
    %c0_i32_1 = arith.constant 0 : i32
    return %c0_i32, %c0_i32_0 : i32, i32
  }
  func.func @transform_5(%arg0: i32) -> (i32, i32) {
    %c0_i32 = arith.constant 0 : i32
    %c0_i32_0 = arith.constant 0 : i32
    return %arg0, %c0_i32 : i32, i32
  }
}

</mosaic_0001>

<llo_original>
// kernel: _lambda_.1
$region0: #{_lambda_.1}
  #allocation0 [shape = 'u32[]', space=smem, size = 0x4, offset = 0x4, fixed_abs, tag = 'smem constant byte address 0x4 - core index']
  #allocation1 [shape = 'u32[144,128]{1,0:T(1,128)}', space=vmem, size = 0x12000, scoped, tag = 'internal scratch']
  %s0 = inlined_call_operand.vmem [shape: bf16[16,32], index: 0, kind: input, shape index: {}]
  %s1 = inlined_call_operand.hbm [shape: bf16[32,64], index: 1, kind: input, shape index: {}]
  %s2 = inlined_call_operand.vmem [shape: f32[1,64], index: 2, kind: input, shape index: {}]
  %s3 = inlined_call_operand.vmem [shape: bf16[64,128], index: 3, kind: input, shape index: {}]
  %s4 = inlined_call_operand.vmem [shape: f32[1,128], index: 4, kind: input, shape index: {}]
  %s5 = inlined_call_operand.hbm [shape: f32[16,20], index: 5, kind: output, shape index: {}]
  %s6 = sld [smem:[#allocation0]]
  $region57: #{_lambda_.1} parent=0
    _
  %s8 = ssub.s32 1, %s6
  %s9 = scalar_select 0, %s8, %s6
  $region1: #{_lambda_.1} parent=0
    #allocation2 [shape = 'u8[8192]{0}', space=vmem, size = 0x2000, scoped, tag = 'input window, operand 1, single buffered']
    #allocation3 [shape = 's32[2]{0}', space=sflag, size = 0x8, scoped, tag = 'scoped memory for _lambda_.1']
    #allocation4 [shape = 's32[2]{0}', space=sflag, size = 0x8, scoped, tag = 'scoped memory for _lambda_.1']
    #allocation5 [shape = 'u8[8192]{0}', space=vmem, size = 0x2000, scoped, tag = 'output window, operand 0']
    %10 = vsyncpa [#allocation3], 0
    %11 = vsyncpa [#allocation4], 0
    %s12 = scalar_lea.sflag [#allocation4], 1
    %13 = vsyncpa %s12, 0
    loop: start=0, step=1, limit=4
    $region2: #{_lambda_.1} parent=1 // loop_pre_header
      _
    $region3: #{_lambda_.1} parent=1 // loop_header
      %s15 = sphi 0, %s19
      %p16 = scmp.ge.s32.totalorder %s15, 4
      %s25 = sphi 0, %s27
      %s28 = sphi 0, %s25
      %s29 = sphi 0, %s28
      %s45 = sphi 0, %s29
      %s49 = sphi 0, %s49
      %s51 = sphi 0, %s49
      %s52 = sphi 0, %s51
      %s66 = sphi 0, %s52
      %s70 = sphi 0, %s70
      %s72 = sphi 0, %s70
      %s73 = sphi 0, %s72
      %s87 = sphi 0, %s73
      %s91 = sphi 0, %s91
      %s93 = sphi 0, %s91
      %s94 = sphi 0, %s93
      %s108 = sphi 0, %s94
      %s112 = sphi 0, %s112
      %s114 = sphi 0, %s112
      %s115 = sphi 0, %s114
      %s129 = sphi 0, %s115
      %s135 = sphi 0, %s137
      %s138 = sphi 0, %s135
      %s139 = sphi 0, %s138
      %s155 = sphi 0, %s139
    $region4: #{_lambda_.1} parent=1 // loop_header_branch
      %18 = sbr.rel (%p16) target = $region8
    $region5: #{_lambda_.1} parent=1 // loop_body
      %s20 = ssub.s32 %s15, 1
      %s21 = ssub.s32 %s15, 2
      %s22 = sadd.s32 %s15, 1
      %s23 = ssub.s32 %s15, %s22
      %p24 = scmp.eq.s32.totalorder %s23, 0
      %s26 = sadd.s32 %s25, 1
      %s27 = scalar_select %p24, %s25, %s26
      %p30 = pneg %p24
      %p31 = scmp.eq.s32.totalorder %s15, 1
      %p32 = por %p30, %p31
      %p33 = scmp.ne.s32.totalorder %s25, %s28
      %p34 = scmp.eq.s32.totalorder %s15, 0
      %p35 = por %p33, %p34
      %p36 = scmp.ne.s32.totalorder %s25, %s28
      %p37 = scmp.eq.s32.totalorder %s20, 1
      %p38 = por %p36, %p37
      %p39 = scmp.ne.s32.totalorder %s28, %s29
      %p40 = scmp.eq.s32.totalorder %s20, 0
      %p41 = por %p39, %p40
      %p42 = scmp.ne.s32.totalorder %s28, %s29
      %p43 = scmp.eq.s32.totalorder %s21, 1
      %p44 = por %p42, %p43
      %p46 = scmp.ne.s32.totalorder %s29, %s45
      %p47 = scmp.eq.s32.totalorder %s21, 0
      %p48 = por %p46, %p47
      %s50 = sadd.s32 %s49, 1
      %p53 = scmp.eq.s32.totalorder %s15, 1
      %p54 = scmp.ne.s32.totalorder %s49, %s51
      %p55 = scmp.eq.s32.totalorder %s15, 0
      %p56 = por %p54, %p55
      %p57 = scmp.ne.s32.totalorder %s49, %s51
      %p58 = scmp.eq.s32.totalorder %s20, 1
      %p59 = por %p57, %p58
      %p60 = scmp.ne.s32.totalorder %s51, %s52
      %p61 = scmp.eq.s32.totalorder %s20, 0
      %p62 = por %p60, %p61
      %p63 = scmp.ne.s32.totalorder %s51, %s52
      %p64 = scmp.eq.s32.totalorder %s21, 1
      %p65 = por %p63, %p64
      %p67 = scmp.ne.s32.totalorder %s52, %s66
      %p68 = scmp.eq.s32.totalorder %s21, 0
      %p69 = por %p67, %p68
      %s71 = sadd.s32 %s70, 1
      %p74 = scmp.eq.s32.totalorder %s15, 1
      %p75 = scmp.ne.s32.totalorder %s70, %s72
      %p76 = scmp.eq.s32.totalorder %s15, 0
      %p77 = por %p75, %p76
      %p78 = scmp.ne.s32.totalorder %s70, %s72
      %p79 = scmp.eq.s32.totalorder %s20, 1
      %p80 = por %p78, %p79
      %p81 = scmp.ne.s32.totalorder %s72, %s73
      %p82 = scmp.eq.s32.totalorder %s20, 0
      %p83 = por %p81, %p82
      %p84 = scmp.ne.s32.totalorder %s72, %s73
      %p85 = scmp.eq.s32.totalorder %s21, 1
      %p86 = por %p84, %p85
      %p88 = scmp.ne.s32.totalorder %s73, %s87
      %p89 = scmp.eq.s32.totalorder %s21, 0
      %p90 = por %p88, %p89
      %s92 = sadd.s32 %s91, 1
      %p95 = scmp.eq.s32.totalorder %s15, 1
      %p96 = scmp.ne.s32.totalorder %s91, %s93
      %p97 = scmp.eq.s32.totalorder %s15, 0
      %p98 = por %p96, %p97
      %p99 = scmp.ne.s32.totalorder %s91, %s93
      %p100 = scmp.eq.s32.totalorder %s20, 1
      %p101 = por %p99, %p100
      %p102 = scmp.ne.s32.totalorder %s93, %s94
      %p103 = scmp.eq.s32.totalorder %s20, 0
      %p104 = por %p102, %p103
      %p105 = scmp.ne.s32.totalorder %s93, %s94
      %p106 = scmp.eq.s32.totalorder %s21, 1
      %p107 = por %p105, %p106
      %p109 = scmp.ne.s32.totalorder %s94, %s108
      %p110 = scmp.eq.s32.totalorder %s21, 0
      %p111 = por %p109, %p110
      %s113 = sadd.s32 %s112, 1
      %p116 = scmp.eq.s32.totalorder %s15, 1
      %p117 = scmp.ne.s32.totalorder %s112, %s114
      %p118 = scmp.eq.s32.totalorder %s15, 0
      %p119 = por %p117, %p118
      %p120 = scmp.ne.s32.totalorder %s112, %s114
      %p121 = scmp.eq.s32.totalorder %s20, 1
      %p122 = por %p120, %p121
      %p123 = scmp.ne.s32.totalorder %s114, %s115
      %p124 = scmp.eq.s32.totalorder %s20, 0
      %p125 = por %p123, %p124
      %p126 = scmp.ne.s32.totalorder %s114, %s115
      %p127 = scmp.eq.s32.totalorder %s21, 1
      %p128 = por %p126, %p127
      %p130 = scmp.ne.s32.totalorder %s115, %s129
      %p131 = scmp.eq.s32.totalorder %s21, 0
      %p132 = por %p130, %p131
      %s133 = ssub.s32 %s15, %s22
      %p134 = scmp.eq.s32.totalorder %s133, 0
      %s136 = sadd.s32 %s135, 1
      %s137 = scalar_select %p134, %s135, %s136
      %p140 = pneg %p134
      %p141 = scmp.eq.s32.totalorder %s15, 1
      %p142 = por %p140, %p141
      %p143 = scmp.ne.s32.totalorder %s135, %s138
      %p144 = scmp.eq.s32.totalorder %s15, 0
      %p145 = por %p143, %p144
      %p146 = scmp.ne.s32.totalorder %s135, %s138
      %p147 = scmp.eq.s32.totalorder %s20, 1
      %p148 = por %p146, %p147
      %p149 = scmp.ne.s32.totalorder %s138, %s139
      %p150 = scmp.eq.s32.totalorder %s20, 0
      %p151 = por %p149, %p150
      %p152 = scmp.ne.s32.totalorder %s138, %s139
      %p153 = scmp.eq.s32.totalorder %s21, 1
      %p154 = por %p152, %p153
      %p156 = scmp.ne.s32.totalorder %s139, %s155
      %p157 = scmp.eq.s32.totalorder %s21, 0
      %p158 = por %p156, %p157
      %p159 = scmp.le.s32.totalorder 1, %s15
      %p160 = scmp.lt.s32.totalorder %s15, 3
      %p161 = pnand %p159, %p160
      %p162 = pneg %p161
      // Predicated region
      $region9: #{_lambda_.1} parent=5 // pred_check
        _
      $region10: #{_lambda_.1} parent=5 // pred_check_branch
        %164 = sbr.rel (%p161) target = $region12
      $region11: #{_lambda_.1} parent=5 // pred_region
        %s165 = ssub.s32 %s15, 1
        // Predicated region
        $region13: #{_lambda_.1} parent=11 // pred_check
          %p166 = pneg %p62
        $region14: #{_lambda_.1} parent=11 // pred_check_branch
          %168 = sbr.rel (%p166) target = $region16
        $region15: #{_lambda_.1} parent=11 // pred_region
          %s170 = ssub.s32 256, 256
          %171 = vsyncadd [#allocation3], %s170
          %s172 = sshll.u32 [#allocation2], 4
          %s173 = int_to_ptr.vmem [resolvable:$true] %s172
          %178 = dma.hbm_to_vmem [thread:$0]  %s1, 256, %s173, [#allocation3], 64, 64, 4
        $region16: #{_lambda_.1} parent=11 // pred_fallthru
          _
        // Predicated region
        $region17: #{_lambda_.1} parent=11 // pred_check
          %p179 = pneg %p83
        $region18: #{_lambda_.1} parent=11 // pred_check_branch
          %181 = sbr.rel (%p179) target = $region20
        $region19: #{_lambda_.1} parent=11 // pred_region
          _
        $region20: #{_lambda_.1} parent=11 // pred_fallthru
          _
        // Predicated region
        $region21: #{_lambda_.1} parent=11 // pred_check
          %p182 = pneg %p104
        $region22: #{_lambda_.1} parent=11 // pred_check_branch
          %184 = sbr.rel (%p182) target = $region24
        $region23: #{_lambda_.1} parent=11 // pred_region
          _
        $region24: #{_lambda_.1} parent=11 // pred_fallthru
          _
        // Predicated region
        $region25: #{_lambda_.1} parent=11 // pred_check
          %p185 = pneg %p125
        $region26: #{_lambda_.1} parent=11 // pred_check_branch
          %187 = sbr.rel (%p185) target = $region28
        $region27: #{_lambda_.1} parent=11 // pred_region
          _
        $region28: #{_lambda_.1} parent=11 // pred_fallthru
          _
      $region12: #{_lambda_.1} parent=5 // pred_fallthru
        _
      %p188 = scmp.lt.s32.totalorder %s15, 2
      // Predicated region
      $region29: #{_lambda_.1} parent=5 // pred_check
        %p189 = pneg %p188
      $region30: #{_lambda_.1} parent=5 // pred_check_branch
        %191 = sbr.rel (%p189) target = $region32
      $region31: #{_lambda_.1} parent=5 // pred_region
        // Predicated region
        $region33: #{_lambda_.1} parent=31 // pred_check
          %p192 = pneg %p35
        $region34: #{_lambda_.1} parent=31 // pred_check_branch
          %194 = sbr.rel (%p192) target = $region36
        $region35: #{_lambda_.1} parent=31 // pred_region
          %p195 = scmp.lt.s32.totalorder %s15, 1
          %s196 = scalar_select %p195, %s15, 1
          %s197 = smul.addr %s196, 4
          %s198 = scalar_lea.vmem %s0, %s197
        $region36: #{_lambda_.1} parent=31 // pred_fallthru
          _
      $region32: #{_lambda_.1} parent=5 // pred_fallthru
        _
      %p199 = scmp.le.s32.totalorder 1, %s15
      %p200 = scmp.lt.s32.totalorder %s15, 3
      %p201 = pnand %p199, %p200
      %p202 = pneg %p201
      // Predicated region
      $region37: #{_lambda_.1} parent=5 // pred_check
        _
      $region38: #{_lambda_.1} parent=5 // pred_check_branch
        %204 = sbr.rel (%p201) target = $region40
      $region39: #{_lambda_.1} parent=5 // pred_region
        %s205 = ssub.s32 %s15, 1
        // Predicated region
        $region41: #{_lambda_.1} parent=39 // pred_check
          %p206 = pneg %p62
        $region42: #{_lambda_.1} parent=39 // pred_check_branch
          %208 = sbr.rel (%p206) target = $region44
        $region43: #{_lambda_.1} parent=39 // pred_region
          %209 = dma.done [#allocation3], 256
        $region44: #{_lambda_.1} parent=39 // pred_fallthru
          _
        %p210 = scmp.lt.s32.totalorder %s20, 1
        %s211 = scalar_select %p210, %s20, 1
        %s212 = smul.addr %s211, 4
        %s213 = scalar_lea.vmem %s0, %s212
        %p214 = pneg %p41
        %p215 = pneg %p38
        %p216 = pneg %p62
        %p217 = pneg %p59
        %p218 = pneg %p83
        %p219 = pneg %p80
        %p220 = pneg %p104
        %p221 = pneg %p101
        %p222 = pneg %p125
        %p223 = pneg %p122
        %p224 = pneg %p151
        %p225 = pneg %p148
        %s226 = sand.u32 %s138, 1
        %s227 = scalar_lea.sflag [#allocation4], %s226
        %s228 = sand.u32 %s138, 1
        %s229 = smul.addr %s228, 8
        %s230 = scalar_lea.vmem [#allocation5], %s229
        %p231 = scmp.lt.s32.totalorder %s20, 1
        %s232 = scalar_select %p231, %s20, 1
        %s233 = smul.addr %s232, 4
        %s234 = scalar_lea.vmem %s0, %s233
        %v236 = vld [vmem:[%s234] sm:$0xf]
        %v237 = vld [vmem:[#allocation2] sm:$0xf]
        %v238 = vld [vmem:[#allocation2 + $0x4] sm:$0xf]
        %v239 = vld [vmem:[#allocation2 + $0x8] sm:$0xf]
        %v240 = vld [vmem:[#allocation2 + $0xc] sm:$0xf]
        %v241 = vld [vmem:[%s2] sm:$0x1]
        %v243 = vlaneseq
        %v244 = vshrl.u32 %v243, 7
        %v245 = vsub.s32 0, %v244
        %v246 = vrot.slane %v241, %v245
        %v252 = vunpack.c.l.b16 %v237
        %v253 = vunpack.c.l.b16 %v238
        %v254 = vunpack.c.l.b16 %v239
        %v255 = vunpack.c.l.b16 %v240
        %v256 = vpack.c.b16 %v253, %v252
        %v257 = vpack.c.b16 %v255, %v254
        %vm260 = vcmask 261120
        %v262 = vsel %vm260, %v236, 0
        %264 = vmatprep.subr.bf16.mxu0 0
        %265 = vmatpush1.bf16.msra.mxu0 %v256
        %266 = vmatprep.subr.bf16.mxu0 0
        %267 = vmatpush1.bf16.msra.mxu0 %v257
        %268 = vmatprep.subr.bf16.mxu0 0
        %269 = vmatpush1.bf16.msra.mxu0 0
        %270 = vmatprep.subr.bf16.mxu0 0
        %271 = vmatpush1.bf16.msra.mxu0 0
        %272 = vmatprep.subr.bf16.mxu0 0
        %273 = vmatpush1.bf16.msra.mxu0 0
        %274 = vmatprep.subr.bf16.mxu0 0
        %275 = vmatpush1.bf16.msra.mxu0 0
        %276 = vmatprep.subr.bf16.mxu0 0
        %277 = vmatpush1.bf16.msra.mxu0 0
        %278 = vmatprep.subr.bf16.mxu0 0
        %279 = vmatpush1.bf16.msra.mxu0 0
        %280 = vmatprep.subr.bf16.mxu0 0
        %281 = vmatpush1.bf16.msra.mxu0 0
        %282 = vmatprep.subr.bf16.mxu0 0
        %283 = vmatpush1.bf16.msra.mxu0 0
        %284 = vmatprep.subr.bf16.mxu0 0
        %285 = vmatpush1.bf16.msra.mxu0 0
        %286 = vmatprep.subr.bf16.mxu0 0
        %287 = vmatpush1.bf16.msra.mxu0 0
        %288 = vmatprep.subr.bf16.mxu0 0
        %289 = vmatpush1.bf16.msra.mxu0 0
        %290 = vmatprep.subr.bf16.mxu0 0
        %291 = vmatpush1.bf16.msra.mxu0 0
        %292 = vmatprep.subr.bf16.mxu0 0
        %293 = vmatpush1.bf16.msra.mxu0 0
        %294 = vmatprep.subr.bf16.mxu0 0
        %295 = vmatpush1.bf16.msra.mxu0 0
        %296 = vmatprep.mubr.bf16.mxu0 0
        %297 = vmatmul.mubr.bf16.gmra.mrb[0].mxu0 %v262
        %v298 = vpop.f32.mrb[0].mxu0
        %v299 = vadd.f32 %v246, %v298
        %v300 = vpop.f32.mrb[0].mxu0
        %v301 = vpop.f32.mrb[0].mxu0
        %v302 = vpop.f32.mrb[0].mxu0
        %303 = vdwg.mxu0
        %v304 = vmax.f32 %v299, 0.0
        %v305 = vpack.c.bf16 %v304, %v304
        %v306 = vld [vmem:[%s3] sm:$0xf]
        %v307 = vld [vmem:[%s3 + $0x4] sm:$0xf]
        %v308 = vld [vmem:[%s3 + $0x8] sm:$0xf]
        %v309 = vld [vmem:[%s3 + $0xc] sm:$0xf]
        %v310 = vld [vmem:[%s3 + $0x10] sm:$0xf]
        %v311 = vld [vmem:[%s3 + $0x14] sm:$0xf]
        %v312 = vld [vmem:[%s3 + $0x18] sm:$0xf]
        %v313 = vld [vmem:[%s3 + $0x1c] sm:$0xf]
        %v314 = vld [vmem:[%s4] sm:$0x1]
        %v316 = vlaneseq
        %v317 = vshrl.u32 %v316, 7
        %v318 = vsub.s32 0, %v317
        %v319 = vrot.slane %v314, %v318
        %v329 = vunpack.c.l.b16 %v306
        %v330 = vunpack.c.l.b16 %v307
        %v331 = vunpack.c.l.b16 %v308
        %v332 = vunpack.c.l.b16 %v309
        %v333 = vunpack.c.l.b16 %v310
        %v334 = vunpack.c.l.b16 %v311
        %v335 = vunpack.c.l.b16 %v312
        %v336 = vunpack.c.l.b16 %v313
        %v337 = vpack.c.b16 %v330, %v329
        %v338 = vpack.c.b16 %v332, %v331
        %v339 = vpack.c.b16 %v334, %v333
        %v340 = vpack.c.b16 %v336, %v335
        %vm345 = vcmask 523264
        %v347 = vsel %vm345, %v305, 0
        %349 = vmatprep.subr.bf16.mxu0 0
        %350 = vmatpush1.bf16.msra.mxu0 %v337
        %351 = vmatprep.subr.bf16.mxu0 0
        %352 = vmatpush1.bf16.msra.mxu0 %v338
        %353 = vmatprep.subr.bf16.mxu0 0
        %354 = vmatpush1.bf16.msra.mxu0 %v339
        %355 = vmatprep.subr.bf16.mxu0 0
        %356 = vmatpush1.bf16.msra.mxu0 %v340
        %357 = vmatprep.subr.bf16.mxu0 0
        %358 = vmatpush1.bf16.msra.mxu0 0
        %359 = vmatprep.subr.bf16.mxu0 0
        %360 = vmatpush1.bf16.msra.mxu0 0
        %361 = vmatprep.subr.bf16.mxu0 0
        %362 = vmatpush1.bf16.msra.mxu0 0
        %363 = vmatprep.subr.bf16.mxu0 0
        %364 = vmatpush1.bf16.msra.mxu0 0
        %365 = vmatprep.subr.bf16.mxu0 0
        %366 = vmatpush1.bf16.msra.mxu0 0
        %367 = vmatprep.subr.bf16.mxu0 0
        %368 = vmatpush1.bf16.msra.mxu0 0
        %369 = vmatprep.subr.bf16.mxu0 0
        %370 = vmatpush1.bf16.msra.mxu0 0
        %371 = vmatprep.subr.bf16.mxu0 0
        %372 = vmatpush1.bf16.msra.mxu0 0
        %373 = vmatprep.subr.bf16.mxu0 0
        %374 = vmatpush1.bf16.msra.mxu0 0
        %375 = vmatprep.subr.bf16.mxu0 0
        %376 = vmatpush1.bf16.msra.mxu0 0
        %377 = vmatprep.subr.bf16.mxu0 0
        %378 = vmatpush1.bf16.msra.mxu0 0
        %379 = vmatprep.subr.bf16.mxu0 0
        %380 = vmatpush1.bf16.msra.mxu0 0
        %381 = vmatprep.mubr.bf16.mxu0 0
        %382 = vmatmul.mubr.bf16.gmra.mrb[0].mxu0 %v347
        %v383 = vpop.f32.mrb[0].mxu0
        %v384 = vadd.f32 %v319, %v383
        %v385 = vpop.f32.mrb[0].mxu0
        %v386 = vpop.f32.mrb[0].mxu0
        %v387 = vpop.f32.mrb[0].mxu0
        %388 = vdwg.mxu0
        %v389 = vlaneseq
        %v390 = vand.u32 %v389, 127
        %vm391 = vcmp.lt.s32.totalorder %v390, 20
        %v392 = vsel %vm391, %v384, -1e+30
        %393 = vmax.xlane.f32.xlu0 %v392
        %v394 = vpop.xlane.xlu0 %393
        %v395 = vsub.f32 %v392, %v394
        %v396 = vmul.f32 %v395, 1.442695
        %v397 = vpow.pop %v396
        %398 = vadd.xlane.f32.xlu0 %v397
        %v399 = vpop.xlane.xlu0 %398
        %v400 = vrcp.pop %v399
        %v401 = vmul.f32 %v397, %v400
        %vm402 = vcmask 162816
        %403 = vst.msk [vmem:[%s230] sm:$0xff] %vm402, %v401
        %s404 = sand.u32 %s138, 1
        %s405 = scalar_lea.sflag [#allocation4], %s404
        %s406 = sand.u32 %s138, 1
        %s407 = smul.addr %s406, 8
        %s408 = scalar_lea.vmem [#allocation5], %s407
        // Predicated region
        $region45: #{_lambda_.1} parent=39 // pred_check
          %p409 = pneg %p148
        $region46: #{_lambda_.1} parent=39 // pred_check_branch
          %411 = sbr.rel (%p409) target = $region48
        $region47: #{_lambda_.1} parent=39 // pred_region
          %s413 = ssub.s32 128, 128
          %414 = vsyncadd %s405, %s413
          %s415 = smul.addr %s20, 128
          %s416 = scalar_lea.hbm %s5, %s415
          %s418 = sshll.u32 %s408, 4
          %s419 = int_to_ptr.vmem [resolvable:$true] %s418
          %421 = dma.vmem_to_hbm [thread:$0]  %s419, 128, %s416, %s405
        $region48: #{_lambda_.1} parent=39 // pred_fallthru
          _
      $region40: #{_lambda_.1} parent=5 // pred_fallthru
        _
      %p422 = scmp.le.s32.totalorder 2, %s15
      // Predicated region
      $region49: #{_lambda_.1} parent=5 // pred_check
        %p423 = pneg %p422
      $region50: #{_lambda_.1} parent=5 // pred_check_branch
        %425 = sbr.rel (%p423) target = $region52
      $region51: #{_lambda_.1} parent=5 // pred_region
        %s426 = ssub.s32 %s15, 2
        // Predicated region
        $region53: #{_lambda_.1} parent=51 // pred_check
          %p427 = pneg %p154
        $region54: #{_lambda_.1} parent=51 // pred_check_branch
          %429 = sbr.rel (%p427) target = $region56
        $region55: #{_lambda_.1} parent=51 // pred_region
          %s430 = sand.u32 %s139, 1
          %s431 = scalar_lea.sflag [#allocation4], %s430
          %s432 = sand.u32 %s139, 1
          %s433 = smul.addr %s432, 8
          %s434 = scalar_lea.vmem [#allocation5], %s433
          %435 = dma.done %s431, 128
        $region56: #{_lambda_.1} parent=51 // pred_fallthru
          _
      $region52: #{_lambda_.1} parent=5 // pred_fallthru
        _
    $region6: #{_lambda_.1} parent=1 // loop_footer
      %s19 = sadd.s32 1, %s15
    $region7: #{_lambda_.1} parent=1 // loop_footer_branch
      %14 = sbr.rel target = $region3
    $region8: #{_lambda_.1} parent=1 // loop_exit
      _
    %436 = vsyncpa [#allocation3], 1
    %s437 = scalar_lea.sflag [#allocation3], 1
    %438 = vsyncpa %s437, 1
    %439 = vsyncpa [#allocation4], 1
    %s440 = scalar_lea.sflag [#allocation4], 1
    %441 = vsyncpa %s440, 1

</llo_original>
